<compile_context>
chip_gen: v5e
topology: v5e:2x2
jax: 0.10.0
libtpu: 0.0.40
codegen_flags: <defaults>
</compile_context>

<pallas_src>
import functools

import jax
import jax.numpy as jnp
from jax.experimental import pallas as pl
from jax.experimental.pallas import tpu as pltpu

_LANE = 128
_NEG_LARGE = -1e30


def _round_up(x, m):
    return ((x + m - 1) // m) * m


def _full_spec(shape):
    # whole-array block (block == full dims satisfies the (8,128) rule)
    return pl.BlockSpec(shape, lambda: (0,) * len(shape))


# ------------------------------ fused kernel --------------------------------


def _ngcn_fused_kernel(a_ref, x_ref, w_ref, b_ref, o_ref, *,
                       f_pad, col_offsets, class_number):
    a = a_ref[...]                                # (N, N)     bf16 (pre-cast at setup)
    x = x_ref[...].astype(jnp.bfloat16)           # (N, F_pad) f32 -> bf16 in-kernel

    # Static zero-cost ref slices into the packed weight / bias slabs.
    w_cat = w_ref[0:f_pad, :]                     # (F_pad, T_pad) bf16
    w_fc = w_ref[f_pad:, :]                       # (T_pad, C_pad) bf16
    b_cat = b_ref[0:1, :]                         # (1, T_pad)     f32
    b_fc = b_ref[1:2, :]                          # (1, C_pad)     f32

    # All branch feature transforms in one wide MXU pass:
    #   H = relu(X @ [W_1 | ... | W_k | 0pad] + [b_1 | ... | b_k | 0pad])
    # Bias add / ReLU in f32 (VPU), then carry h as bf16 storage.
    h_f32 = jnp.dot(x, w_cat, preferred_element_type=jnp.float32)
    h_f32 = jnp.maximum(h_f32 + b_cat, 0.0)       # (N, T_pad) f32
    h = h_f32.astype(jnp.bfloat16)                # bf16 carry: ~half the live vregs

    # Shared adjacency propagation: propagation step s applies A to all
    # columns whose branch offset >= col_offsets[s]  (branch i needs i steps).
    col = jax.lax.broadcasted_iota(jnp.int32, h.shape, dimension=1)
    for off in col_offsets[1:]:
        ah = jnp.dot(a, h, preferred_element_type=jnp.float32)
        ah = ah.astype(jnp.bfloat16)              # select operates on bf16 operands
        h = jnp.where(col >= off, ah, h)

    # Final classifier on the lane-dense padded slab + masked log-softmax
    # (f32 math on VPU/EUP; exp/log/recip stay f32 for v5e compatibility).
    z = jnp.dot(h, w_fc, preferred_element_type=jnp.float32)
    z = z + b_fc                                  # (N, C_pad) f32
    lane = jax.lax.broadcasted_iota(jnp.int32, z.shape, dimension=1)
    valid = lane < class_number
    z = jnp.where(valid, z, _NEG_LARGE)
    m = jnp.max(z, axis=-1, keepdims=True)
    s = z - m
    denom = jnp.sum(jnp.where(valid, jnp.exp(s), 0.0), axis=-1, keepdims=True)
    lse = jnp.log(denom)
    o_ref[...] = jnp.where(valid, s - lse, 0.0)


def ngcn_fused_call(adjacency_bf16, features_padded, w_slab, b_slab,
                    f_pad, col_offsets, class_number):
    n = features_padded.shape[0]
    c_pad = w_slab.shape[1]
    kernel = functools.partial(_ngcn_fused_kernel,
                               f_pad=f_pad,
                               col_offsets=col_offsets,
                               class_number=class_number)
    # Returns the padded (N, C_pad) slab; valid classes are [:, :class_number].
    return pl.pallas_call(
        kernel,
        out_shape=jax.ShapeDtypeStruct((n, c_pad), jnp.float32),
        in_specs=[
            _full_spec(adjacency_bf16.shape),
            _full_spec(features_padded.shape),
            _full_spec(w_slab.shape),
            _full_spec(b_slab.shape),
        ],
        out_specs=_full_spec((n, c_pad)),
        compiler_params=pltpu.CompilerParams(
            vmem_limit_bytes=32 * 1024 * 1024),
    )(adjacency_bf16, features_padded, w_slab, b_slab)


# ----------------------------- params / packing -----------------------------


def xavier_uniform(key, shape):
    fan_in, fan_out = shape[0], shape[1]
    limit = jnp.sqrt(6.0 / (fan_in + fan_out))
    return jax.random.uniform(key, shape, jnp.float32, -limit, limit)


def init_ngcn_params(key, feature_number, layers, class_number):
    # NOTE: the reference NGCNLayer's exact bias init is not given; xavier on
    # the (1, out_ch) bias is an init choice, not a kernel-semantics issue.
    params = {"W": [], "b": []}
    keys = jax.random.split(key, 2 * len(layers) + 2)
    for i, out_ch in enumerate(layers):
        params["W"].append(xavier_uniform(keys[2 * i], (feature_number, out_ch)))
        params["b"].append(xavier_uniform(keys[2 * i + 1], (1, out_ch)))
    total = sum(layers)
    # torch.nn.Linear(total, class_number): weight (C, total), bias (C,)
    lim = 1.0 / jnp.sqrt(jnp.float32(total))
    params["W_fc"] = jax.random.uniform(keys[-2], (class_number, total),
                                        jnp.float32, -lim, lim)
    params["b_fc"] = jax.random.uniform(keys[-1], (class_number,),
                                        jnp.float32, -lim, lim)
    return params


def pack_ngcn_params(params, layers, class_number, feature_number):
    """One-time packing: concat + pad branch weights, pre-transpose W_fc, and
    fuse everything into one bf16 weight slab + one f32 bias slab."""
    assert class_number >= 1
    total = sum(layers)
    f_pad = _round_up(feature_number, _LANE)
    t_pad = _round_up(total, _LANE)
    c_pad = _round_up(class_number, _LANE)
    # single-slab packing requires matching lane widths (both 128 here)
    assert t_pad == c_pad == _LANE, "slab packing assumes one lane tile"

    w_cat = jnp.concatenate(params["W"], axis=1)                    # (F, total)
    b_cat = jnp.concatenate(params["b"], axis=1)                    # (1, total)
    w_cat = jnp.pad(w_cat, ((0, f_pad - feature_number), (0, t_pad - total)))
    b_cat = jnp.pad(b_cat, ((0, 0), (0, t_pad - total)))

    # pre-transpose (C, total) -> (total, C) once, then pad both dims
    w_fc = jnp.pad(params["W_fc"].T,
                   ((0, t_pad - total), (0, c_pad - class_number)))
    b_fc = jnp.pad(params["b_fc"].reshape(1, -1),
                   ((0, 0), (0, c_pad - class_number)))

    # One contiguous bf16 weight slab: rows [0, f_pad) = W_cat,
    #                                  rows [f_pad, f_pad+t_pad) = W_fc^T.
    w_slab = jnp.concatenate([w_cat, w_fc], axis=0).astype(jnp.bfloat16)
    # One contiguous f32 bias slab: row 0 = b_cat, row 1 = b_fc.
    b_slab = jnp.concatenate([b_cat, b_fc], axis=0).astype(jnp.float32)

    packed = {"W_slab": w_slab, "b_slab": b_slab}
    # column offset of each branch inside the concatenated feature block
    col_offsets = tuple(int(sum(layers[:i])) for i in range(len(layers)))
    return packed, col_offsets, f_pad


def prepare_graph_inputs(adjacency, features, feature_number):
    """One-time per-graph prep (outside the per-call path): bf16 adjacency,
    lane-padded f32 feature matrix."""
    f_pad = _round_up(feature_number, _LANE)
    a_bf16 = adjacency.astype(jnp.bfloat16)
    x_pad = jnp.pad(features.astype(jnp.float32),
                    ((0, 0), (0, f_pad - feature_number)))
    return a_bf16, x_pad


@functools.partial(jax.jit,
                   static_argnames=("f_pad", "col_offsets", "class_number"))
def ngcn_forward(packed, adjacency_bf16, features_padded,
                 f_pad, col_offsets, class_number):
    """Forward pass of NGCNNetwork (eval mode, dropout = identity).

    Returns the lane-dense padded (N, 128) log-softmax slab; valid class
    columns are [0, class_number).  The jitted program is a single fused
    Pallas custom call (no extra convert / slice ops).
    """
    return ngcn_fused_call(adjacency_bf16, features_padded,
                           packed["W_slab"], packed["b_slab"],
                           f_pad, col_offsets, class_number)


# ----------------------------------- main ------------------------------------


if __name__ == "__main__":
    N = 64                  # number of graph nodes
    F = 32                  # feature_number
    LAYERS = (16, 16, 16)   # args.layers  -> order = 3
    C = 8                   # class_number

    key = jax.random.PRNGKey(0)
    k_params, k_feat, k_adj = jax.random.split(key, 3)

    params = init_ngcn_params(k_params, F, LAYERS, C)
    packed, col_offsets, f_pad = pack_ngcn_params(params, LAYERS, C, F)

    # dense feature matrix
    features = jax.random.normal(k_feat, (N, F), jnp.float32)

    # symmetric normalized adjacency  D^-1/2 (A + I) D^-1/2 from a random graph
    raw = jax.random.uniform(k_adj, (N, N), jnp.float32)
    adj = (raw + raw.T) * 0.5
    adj = (adj > 0.85).astype(jnp.float32)
    adj = adj + jnp.eye(N, dtype=jnp.float32)
    deg = jnp.sum(adj, axis=1)
    d_inv_sqrt = 1.0 / jnp.sqrt(deg)
    adjacency = adj * d_inv_sqrt[:, None] * d_inv_sqrt[None, :]

    # one-time per-graph preparation (cast / pad done outside the forward path)
    a_bf16, x_pad = prepare_graph_inputs(adjacency, features, F)
    a_bf16, x_pad = jax.block_until_ready((a_bf16, x_pad))

    preds_pad = ngcn_forward(packed, a_bf16, x_pad, f_pad, col_offsets, C)
    preds_pad = jax.block_until_ready(preds_pad)

    assert preds_pad.shape == (N, _LANE)
    # consumer indexes the valid class lanes of the padded slab
    preds = preds_pad[:, :C]
    assert preds.shape == (N, C)
    assert bool(jnp.all(jnp.isfinite(preds)))
    # rows of log_softmax must exponentiate-sum to 1 over the valid lanes
    row_sums = jnp.sum(jnp.exp(preds), axis=1)
    assert bool(jnp.allclose(row_sums, 1.0, atol=1e-4))

    print("KERNEL_OK")
</pallas_src>

<mosaic_0001>
module attributes {stable_mosaic.version = 11 : i64} {
  func.func @_ngcn_fused_kernel(%arg0: memref<64x64xbf16, #tpu.memory_space<vmem>>, %arg1: memref<64x128xf32, #tpu.memory_space<vmem>>, %arg2: memref<256x128xbf16, #tpu.memory_space<vmem>>, %arg3: memref<2x128xf32, #tpu.memory_space<vmem>>, %arg4: memref<64x128xf32, #tpu.memory_space<vmem>>) attributes {dimension_semantics = [], scalar_prefetch = 0 : i64, scratch_operands = 0 : i64, tpu.core_type = #tpu.core_type<tc>} {
    %c0 = arith.constant 0 : index
    %c0_0 = arith.constant 0 : index
    %0 = vector.load %arg0[%c0, %c0_0] : memref<64x64xbf16, #tpu.memory_space<vmem>>, vector<64x64xbf16>
    %c0_1 = arith.constant 0 : index
    %c0_2 = arith.constant 0 : index
    %1 = vector.load %arg1[%c0_1, %c0_2] : memref<64x128xf32, #tpu.memory_space<vmem>>, vector<64x128xf32>
    %2 = arith.truncf %1 : vector<64x128xf32> to vector<64x128xbf16>
    %c0_3 = arith.constant 0 : index
    %c0_4 = arith.constant 0 : index
    %3 = vector.load %arg2[%c0_3, %c0_4] : memref<256x128xbf16, #tpu.memory_space<vmem>>, vector<128x128xbf16>
    %c128 = arith.constant 128 : index
    %c0_5 = arith.constant 0 : index
    %4 = vector.load %arg2[%c128, %c0_5] : memref<256x128xbf16, #tpu.memory_space<vmem>>, vector<128x128xbf16>
    %c0_6 = arith.constant 0 : index
    %c0_7 = arith.constant 0 : index
    %5 = vector.load %arg3[%c0_6, %c0_7] : memref<2x128xf32, #tpu.memory_space<vmem>>, vector<1x128xf32>
    %c1 = arith.constant 1 : index
    %c0_8 = arith.constant 0 : index
    %6 = vector.load %arg3[%c1, %c0_8] : memref<2x128xf32, #tpu.memory_space<vmem>>, vector<1x128xf32>
    %cst = arith.constant dense<0.000000e+00> : vector<64x128xf32>
    %7 = tpu.matmul %2, %3, %cst {dimension_numbers = #tpu.dot_dimension_numbers<[1], [0], [0], [1], [0, 0, 1, 1], [], []>} : vector<64x128xbf16>, vector<128x128xbf16>, vector<64x128xf32> -> vector<64x128xf32>
    %8 = vector.broadcast %5 : vector<1x128xf32> to vector<64x128xf32>
    %9 = arith.addf %7, %8 : vector<64x128xf32>
    %cst_9 = arith.constant 0.000000e+00 : f32
    %10 = vector.broadcast %cst_9 : f32 to vector<64x128xf32>
    %11 = arith.maximumf %9, %10 : vector<64x128xf32>
    %12 = arith.truncf %11 : vector<64x128xf32> to vector<64x128xbf16>
    %13 = tpu.iota {dimensions = array<i32: 1>} : vector<64x128xi32>
    %cst_10 = arith.constant dense<0.000000e+00> : vector<64x128xf32>
    %14 = tpu.matmul %0, %12, %cst_10 {dimension_numbers = #tpu.dot_dimension_numbers<[1], [0], [0], [1], [0, 0, 1, 1], [], []>} : vector<64x64xbf16>, vector<64x128xbf16>, vector<64x128xf32> -> vector<64x128xf32>
    %15 = arith.truncf %14 : vector<64x128xf32> to vector<64x128xbf16>
    %c16_i32 = arith.constant 16 : i32
    %16 = vector.broadcast %c16_i32 : i32 to vector<64x128xi32>
    %17 = arith.cmpi sge, %13, %16 : vector<64x128xi32>
    %18 = arith.select %17, %15, %12 : vector<64x128xi1>, vector<64x128xbf16>
    %cst_11 = arith.constant dense<0.000000e+00> : vector<64x128xf32>
    %19 = tpu.matmul %0, %18, %cst_11 {dimension_numbers = #tpu.dot_dimension_numbers<[1], [0], [0], [1], [0, 0, 1, 1], [], []>} : vector<64x64xbf16>, vector<64x128xbf16>, vector<64x128xf32> -> vector<64x128xf32>
    %20 = arith.truncf %19 : vector<64x128xf32> to vector<64x128xbf16>
    %c32_i32 = arith.constant 32 : i32
    %21 = vector.broadcast %c32_i32 : i32 to vector<64x128xi32>
    %22 = arith.cmpi sge, %13, %21 : vector<64x128xi32>
    %23 = arith.select %22, %20, %18 : vector<64x128xi1>, vector<64x128xbf16>
    %cst_12 = arith.constant dense<0.000000e+00> : vector<64x128xf32>
    %24 = tpu.matmul %23, %4, %cst_12 {dimension_numbers = #tpu.dot_dimension_numbers<[1], [0], [0], [1], [0, 0, 1, 1], [], []>} : vector<64x128xbf16>, vector<128x128xbf16>, vector<64x128xf32> -> vector<64x128xf32>
    %25 = vector.broadcast %6 : vector<1x128xf32> to vector<64x128xf32>
    %26 = arith.addf %24, %25 : vector<64x128xf32>
    %27 = tpu.iota {dimensions = array<i32: 1>} : vector<64x128xi32>
    %c8_i32 = arith.constant 8 : i32
    %28 = vector.broadcast %c8_i32 : i32 to vector<64x128xi32>
    %29 = arith.cmpi slt, %27, %28 : vector<64x128xi32>
    %cst_13 = arith.constant -1.000000e+30 : f32
    %30 = vector.broadcast %cst_13 : f32 to vector<64x128xf32>
    %31 = arith.select %29, %26, %30 : vector<64x128xi1>, vector<64x128xf32>
    %cst_14 = arith.constant dense<0xFF800000> : vector<64xf32>
    %32 = vector.multi_reduction <maximumf>, %31, %cst_14 [1] : vector<64x128xf32> to vector<64xf32>
    %33 = vector.shape_cast %32 : vector<64xf32> to vector<64x1xf32>
    %34 = vector.broadcast %33 : vector<64x1xf32> to vector<64x128xf32>
    %35 = arith.subf %31, %34 : vector<64x128xf32>
    %36 = math.exp %35 : vector<64x128xf32>
    %cst_15 = arith.constant 0.000000e+00 : f32
    %37 = vector.broadcast %cst_15 : f32 to vector<64x128xf32>
    %38 = arith.select %29, %36, %37 : vector<64x128xi1>, vector<64x128xf32>
    %cst_16 = arith.constant dense<0.000000e+00> : vector<64xf32>
    %39 = vector.multi_reduction <add>, %38, %cst_16 [1] : vector<64x128xf32> to vector<64xf32>
    %40 = vector.shape_cast %39 : vector<64xf32> to vector<64x1xf32>
    %41 = math.log %40 : vector<64x1xf32>
    %42 = vector.broadcast %41 : vector<64x1xf32> to vector<64x128xf32>
    %43 = arith.subf %35, %42 : vector<64x128xf32>
    %cst_17 = arith.constant 0.000000e+00 : f32
    %44 = vector.broadcast %cst_17 : f32 to vector<64x128xf32>
    %45 = arith.select %29, %43, %44 : vector<64x128xi1>, vector<64x128xf32>
    %c0_18 = arith.constant 0 : index
    %c0_19 = arith.constant 0 : index
    %46 = vector.load %arg4[%c0_18, %c0_19] : memref<64x128xf32, #tpu.memory_space<vmem>>, vector<64x128xf32>
    tpu.vector_store %arg4[%c0_18, %c0_19], %45 {strides = array<i32>} : memref<64x128xf32, #tpu.memory_space<vmem>>, vector<64x128xf32>,
    return
  }
}

</mosaic_0001>

<llo_original>
// kernel: ngcn_forward.1
$region0: #{ngcn_forward.1}
  #allocation0 [shape = 'u32[]', space=smem, size = 0x4, offset = 0x4, fixed_abs, tag = 'smem constant byte address 0x4 - core index']
  #allocation1 [shape = 'u32[72,128]{1,0:T(1,128)}', space=vmem, size = 0x9000, scoped, tag = 'internal scratch']
  %s0 = inlined_call_operand.hbm [shape: bf16[64,64], index: 0, kind: input, shape index: {}]
  %s1 = inlined_call_operand.hbm [shape: f32[64,128], index: 1, kind: input, shape index: {}]
  %s2 = inlined_call_operand.hbm [shape: bf16[256,128], index: 2, kind: input, shape index: {}]
  %s3 = inlined_call_operand.hbm [shape: f32[2,128], index: 3, kind: input, shape index: {}]
  %s4 = inlined_call_operand.hbm [shape: f32[64,128], index: 4, kind: output, shape index: {}]
  %s5 = sld [smem:[#allocation0]]
  $region42: #{ngcn_forward.1} parent=0
    _
  %s7 = ssub.s32 1, %s5
  %s8 = scalar_select 0, %s7, %s5
  $region1: #{ngcn_forward.1} parent=0
    #allocation2 [shape = 'u8[16384]{0}', space=vmem, size = 0x4000, scoped, tag = 'input window, operand 0, single buffered']
    #allocation3 [shape = 's32[1]{0}', space=sflag, size = 0x4, scoped, tag = 'scoped memory for ngcn_forward.1']
    #allocation4 [shape = 's32[1]{0}', space=sflag, size = 0x4, scoped, tag = 'scoped memory for ngcn_forward.1']
    #allocation5 [shape = 'u8[32768]{0}', space=vmem, size = 0x8000, scoped, tag = 'input window, operand 1, single buffered']
    #allocation6 [shape = 's32[1]{0}', space=sflag, size = 0x4, scoped, tag = 'scoped memory for ngcn_forward.1']
    #allocation7 [shape = 'u8[65536]{0}', space=vmem, size = 0x10000, scoped, tag = 'input window, operand 2, single buffered']
    #allocation8 [shape = 'u8[1024]{0}', space=vmem, size = 0x400, scoped, tag = 'input window, operand 3, single buffered']
    #allocation9 [shape = 's32[1]{0}', space=sflag, size = 0x4, scoped, tag = 'scoped memory for ngcn_forward.1']
    #allocation10 [shape = 'u8[32768]{0}', space=vmem, size = 0x8000, scoped, tag = 'output window, operand 0, single buffered']
    %9 = vsyncpa [#allocation3], 0
    %10 = vsyncpa [#allocation6], 0
    %11 = vsyncpa [#allocation9], 0
    %12 = vsyncpa [#allocation4], 0
    // Predicated region
    $region2: #{ngcn_forward.1} parent=1 // pred_check
      _
    $region3: #{ngcn_forward.1} parent=1 // pred_check_branch
      %14 = sbr.rel (0) target = $region5
    $region4: #{ngcn_forward.1} parent=1 // pred_region
      %16 = vsyncadd [#allocation3], 0
      %s17 = sshll.u32 %s0, 4
      %s18 = int_to_ptr.hbm [resolvable:$true] %s17
      %s19 = sshll.u32 [#allocation2], 4
      %s20 = int_to_ptr.vmem [resolvable:$true] %s19
      %25 = dma.hbm_to_vmem [thread:$0]  %s18, 512, %s20, [#allocation3], 64, 64, 4
    $region5: #{ngcn_forward.1} parent=1 // pred_fallthru
      _
    // Predicated region
    $region6: #{ngcn_forward.1} parent=1 // pred_check
      _
    $region7: #{ngcn_forward.1} parent=1 // pred_check_branch
      %27 = sbr.rel (0) target = $region9
    $region8: #{ngcn_forward.1} parent=1 // pred_region
      %29 = vsyncadd [#allocation6], 0
      %s30 = sshll.u32 %s1, 4
      %s31 = int_to_ptr.hbm [resolvable:$true] %s30
      %s32 = sshll.u32 [#allocation5], 4
      %s33 = int_to_ptr.vmem [resolvable:$true] %s32
      %38 = dma.hbm_to_vmem [thread:$0]  %s31, 1024, %s33, [#allocation6], 128, 128, 8
    $region9: #{ngcn_forward.1} parent=1 // pred_fallthru
      _
    // Predicated region
    $region10: #{ngcn_forward.1} parent=1 // pred_check
      _
    $region11: #{ngcn_forward.1} parent=1 // pred_check_branch
      %40 = sbr.rel (0) target = $region13
    $region12: #{ngcn_forward.1} parent=1 // pred_region
      %42 = vsyncadd [#allocation6], 0
      %s43 = sshll.u32 %s2, 4
      %s44 = int_to_ptr.hbm [resolvable:$true] %s43
      %s45 = sshll.u32 [#allocation7], 4
      %s46 = int_to_ptr.vmem [resolvable:$true] %s45
      %51 = dma.hbm_to_vmem [thread:$0]  %s44, 2048, %s46, [#allocation6], 64, 64, 4
    $region13: #{ngcn_forward.1} parent=1 // pred_fallthru
      _
    // Predicated region
    $region14: #{ngcn_forward.1} parent=1 // pred_check
      _
    $region15: #{ngcn_forward.1} parent=1 // pred_check_branch
      %53 = sbr.rel (0) target = $region17
    $region16: #{ngcn_forward.1} parent=1 // pred_region
      %55 = vsyncadd [#allocation9], 0
      %s57 = sshll.u32 %s3, 4
      %s58 = int_to_ptr.hbm [resolvable:$true] %s57
      %s59 = sshll.u32 [#allocation8], 4
      %s60 = int_to_ptr.vmem [resolvable:$true] %s59
      %62 = dma.hbm_to_vmem [thread:$0]  %s58, 32, %s60, [#allocation9]
    $region17: #{ngcn_forward.1} parent=1 // pred_fallthru
      _
    // Predicated region
    $region18: #{ngcn_forward.1} parent=1 // pred_check
      _
    $region19: #{ngcn_forward.1} parent=1 // pred_check_branch
      %64 = sbr.rel (0) target = $region21
    $region20: #{ngcn_forward.1} parent=1 // pred_region
      %66 = dma.done [#allocation3], 512
    $region21: #{ngcn_forward.1} parent=1 // pred_fallthru
      _
    // Predicated region
    $region22: #{ngcn_forward.1} parent=1 // pred_check
      _
    $region23: #{ngcn_forward.1} parent=1 // pred_check_branch
      %68 = sbr.rel (0) target = $region25
    $region24: #{ngcn_forward.1} parent=1 // pred_region
      %70 = dma.done [#allocation6], 1024
    $region25: #{ngcn_forward.1} parent=1 // pred_fallthru
      _
    // Predicated region
    $region26: #{ngcn_forward.1} parent=1 // pred_check
      _
    $region27: #{ngcn_forward.1} parent=1 // pred_check_branch
      %72 = sbr.rel (0) target = $region29
    $region28: #{ngcn_forward.1} parent=1 // pred_region
      %74 = dma.done [#allocation6], 2048
    $region29: #{ngcn_forward.1} parent=1 // pred_fallthru
      _
    // Predicated region
    $region30: #{ngcn_forward.1} parent=1 // pred_check
      _
    $region31: #{ngcn_forward.1} parent=1 // pred_check_branch
      %76 = sbr.rel (0) target = $region33
    $region32: #{ngcn_forward.1} parent=1 // pred_region
      %78 = dma.done [#allocation9], 32
    $region33: #{ngcn_forward.1} parent=1 // pred_fallthru
      _
    %v80 = vld [vmem:[#allocation2] sm:$0xf]
    %v81 = vld [vmem:[#allocation2 + $0x4] sm:$0xf]
    %v82 = vld [vmem:[#allocation2 + $0x8] sm:$0xf]
    %v83 = vld [vmem:[#allocation2 + $0xc] sm:$0xf]
    %v84 = vld [vmem:[#allocation2 + $0x10] sm:$0xf]
    %v85 = vld [vmem:[#allocation2 + $0x14] sm:$0xf]
    %v86 = vld [vmem:[#allocation2 + $0x18] sm:$0xf]
    %v87 = vld [vmem:[#allocation2 + $0x1c] sm:$0xf]
    %v88 = vld [vmem:[#allocation5] sm:$0xff]
    %v89 = vld [vmem:[#allocation5 + $0x8] sm:$0xff]
    %v90 = vld [vmem:[#allocation5 + $0x10] sm:$0xff]
    %v91 = vld [vmem:[#allocation5 + $0x18] sm:$0xff]
    %v92 = vld [vmem:[#allocation5 + $0x20] sm:$0xff]
    %v93 = vld [vmem:[#allocation5 + $0x28] sm:$0xff]
    %v94 = vld [vmem:[#allocation5 + $0x30] sm:$0xff]
    %v95 = vld [vmem:[#allocation5 + $0x38] sm:$0xff]
    %v96 = vpack.c.bf16 %v89, %v88
    %v97 = vpack.c.bf16 %v91, %v90
    %v98 = vpack.c.bf16 %v93, %v92
    %v99 = vpack.c.bf16 %v95, %v94
    %v100 = vld [vmem:[#allocation7] sm:$0xf]
    %v101 = vld [vmem:[#allocation7 + $0x4] sm:$0xf]
    %v102 = vld [vmem:[#allocation7 + $0x8] sm:$0xf]
    %v103 = vld [vmem:[#allocation7 + $0xc] sm:$0xf]
    %v104 = vld [vmem:[#allocation7 + $0x10] sm:$0xf]
    %v105 = vld [vmem:[#allocation7 + $0x14] sm:$0xf]
    %v106 = vld [vmem:[#allocation7 + $0x18] sm:$0xf]
    %v107 = vld [vmem:[#allocation7 + $0x1c] sm:$0xf]
    %v108 = vld [vmem:[#allocation7 + $0x20] sm:$0xf]
    %v109 = vld [vmem:[#allocation7 + $0x24] sm:$0xf]
    %v110 = vld [vmem:[#allocation7 + $0x28] sm:$0xf]
    %v111 = vld [vmem:[#allocation7 + $0x2c] sm:$0xf]
    %v112 = vld [vmem:[#allocation7 + $0x30] sm:$0xf]
    %v113 = vld [vmem:[#allocation7 + $0x34] sm:$0xf]
    %v114 = vld [vmem:[#allocation7 + $0x38] sm:$0xf]
    %v115 = vld [vmem:[#allocation7 + $0x3c] sm:$0xf]
    %v116 = vld [vmem:[#allocation7 + $0x40] sm:$0xf]
    %v117 = vld [vmem:[#allocation7 + $0x44] sm:$0xf]
    %v118 = vld [vmem:[#allocation7 + $0x48] sm:$0xf]
    %v119 = vld [vmem:[#allocation7 + $0x4c] sm:$0xf]
    %v120 = vld [vmem:[#allocation7 + $0x50] sm:$0xf]
    %v121 = vld [vmem:[#allocation7 + $0x54] sm:$0xf]
    %v122 = vld [vmem:[#allocation7 + $0x58] sm:$0xf]
    %v123 = vld [vmem:[#allocation7 + $0x5c] sm:$0xf]
    %v124 = vld [vmem:[#allocation7 + $0x60] sm:$0xf]
    %v125 = vld [vmem:[#allocation7 + $0x64] sm:$0xf]
    %v126 = vld [vmem:[#allocation7 + $0x68] sm:$0xf]
    %v127 = vld [vmem:[#allocation7 + $0x6c] sm:$0xf]
    %v128 = vld [vmem:[#allocation7 + $0x70] sm:$0xf]
    %v129 = vld [vmem:[#allocation7 + $0x74] sm:$0xf]
    %v130 = vld [vmem:[#allocation7 + $0x78] sm:$0xf]
    %v131 = vld [vmem:[#allocation7 + $0x7c] sm:$0xf]
    %v132 = vld [vmem:[#allocation8] sm:$0x1]
    %v133 = vld [vmem:[#allocation8 + $0x1] sm:$0x1]
    %v134 = vperm.slane %v132, 0
    %v151 = vunpack.c.l.b16 %v100
    %v152 = vunpack.c.l.b16 %v101
    %v153 = vunpack.c.l.b16 %v102
    %v154 = vunpack.c.l.b16 %v103
    %v155 = vunpack.c.l.b16 %v104
    %v156 = vunpack.c.l.b16 %v105
    %v157 = vunpack.c.l.b16 %v106
    %v158 = vunpack.c.l.b16 %v107
    %v159 = vunpack.c.l.b16 %v108
    %v160 = vunpack.c.l.b16 %v109
    %v161 = vunpack.c.l.b16 %v110
    %v162 = vunpack.c.l.b16 %v111
    %v163 = vunpack.c.l.b16 %v112
    %v164 = vunpack.c.l.b16 %v113
    %v165 = vunpack.c.l.b16 %v114
    %v166 = vunpack.c.l.b16 %v115
    %v167 = vpack.c.b16 %v152, %v151
    %v168 = vpack.c.b16 %v154, %v153
    %v169 = vpack.c.b16 %v156, %v155
    %v170 = vpack.c.b16 %v158, %v157
    %v171 = vpack.c.b16 %v160, %v159
    %v172 = vpack.c.b16 %v162, %v161
    %v173 = vpack.c.b16 %v164, %v163
    %v174 = vpack.c.b16 %v166, %v165
    %183 = vmatpush.bf16.msra.mxu0 %v174
    %184 = vmatpush.bf16.msra.mxu0 %v173
    %185 = vmatpush.bf16.msra.mxu0 %v172
    %186 = vmatpush.bf16.msra.mxu0 %v171
    %187 = vmatpush.bf16.msra.mxu0 %v170
    %188 = vmatpush.bf16.msra.mxu0 %v169
    %189 = vmatpush.bf16.msra.mxu0 %v168
    %190 = vmatpush.bf16.msra.mxu0 %v167
    %191 = vmatmul.bf16.gmra.mxu0 %v96
    %v192 = vpop.f32.mrf.mxu0
    %v193 = vadd.f32 %v134, %v192
    %v194 = vpop.f32.mrf.mxu0
    %v195 = vadd.f32 %v134, %v194
    %196 = vmatmul.bf16.gmra.mxu0 %v97
    %v197 = vpop.f32.mrf.mxu0
    %v198 = vadd.f32 %v134, %v197
    %v199 = vpop.f32.mrf.mxu0
    %v200 = vadd.f32 %v134, %v199
    %201 = vmatmul.bf16.gmra.mxu0 %v98
    %v202 = vpop.f32.mrf.mxu0
    %v203 = vadd.f32 %v134, %v202
    %v204 = vpop.f32.mrf.mxu0
    %v205 = vadd.f32 %v134, %v204
    %206 = vmatmul.bf16.gmra.mxu0 %v99
    %v207 = vpop.f32.mrf.mxu0
    %v208 = vadd.f32 %v134, %v207
    %v209 = vpop.f32.mrf.mxu0
    %v210 = vadd.f32 %v134, %v209
    %211 = vdwg.mxu0
    %v212 = vmax.f32 %v193, 0.0
    %v213 = vmax.f32 %v195, 0.0
    %v214 = vmax.f32 %v198, 0.0
    %v215 = vmax.f32 %v200, 0.0
    %v216 = vmax.f32 %v203, 0.0
    %v217 = vmax.f32 %v205, 0.0
    %v218 = vmax.f32 %v208, 0.0
    %v219 = vmax.f32 %v210, 0.0
    %v220 = vpack.c.bf16 %v212, %v212
    %v221 = vpack.c.bf16 %v213, %v213
    %v222 = vpack.c.bf16 %v214, %v214
    %v223 = vpack.c.bf16 %v215, %v215
    %v224 = vpack.c.bf16 %v216, %v216
    %v225 = vpack.c.bf16 %v217, %v217
    %v226 = vpack.c.bf16 %v218, %v218
    %v227 = vpack.c.bf16 %v219, %v219
    %v228 = vlaneseq
    %v229 = vand.u32 %v228, 127
    %v238 = vunpack.c.l.b16 %v80
    %v239 = vunpack.c.l.b16 %v81
    %v240 = vunpack.c.l.b16 %v82
    %v241 = vunpack.c.l.b16 %v83
    %v242 = vunpack.c.l.b16 %v84
    %v243 = vunpack.c.l.b16 %v85
    %v244 = vunpack.c.l.b16 %v86
    %v245 = vunpack.c.l.b16 %v87
    %v246 = vpack.c.b16 %v239, %v238
    %v247 = vpack.c.b16 %v241, %v240
    %v248 = vpack.c.b16 %v243, %v242
    %v249 = vpack.c.b16 %v245, %v244
    %v258 = vunpack.c.l.b16 %v220
    %v259 = vunpack.c.l.b16 %v221
    %v260 = vunpack.c.l.b16 %v222
    %v261 = vunpack.c.l.b16 %v223
    %v262 = vunpack.c.l.b16 %v224
    %v263 = vunpack.c.l.b16 %v225
    %v264 = vunpack.c.l.b16 %v226
    %v265 = vunpack.c.l.b16 %v227
    %v266 = vpack.c.b16 %v259, %v258
    %v267 = vpack.c.b16 %v261, %v260
    %v268 = vpack.c.b16 %v263, %v262
    %v269 = vpack.c.b16 %v265, %v264
    %vm274 = vcmask 523264
    %v276 = vsel %vm274, %v246, 0
    %v279 = vsel %vm274, %v247, 0
    %v282 = vsel %vm274, %v248, 0
    %v285 = vsel %vm274, %v249, 0
    %287 = vmatpush.bf16.msra.mxu0 0
    %288 = vmatpush.bf16.msra.mxu0 0
    %289 = vmatpush.bf16.msra.mxu0 0
    %290 = vmatpush.bf16.msra.mxu0 0
    %291 = vmatpush.bf16.msra.mxu0 %v269
    %292 = vmatpush.bf16.msra.mxu0 %v268
    %293 = vmatpush.bf16.msra.mxu0 %v267
    %294 = vmatpush.bf16.msra.mxu0 %v266
    %295 = vmatmul.bf16.gmra.mxu0 %v276
    %v296 = vpop.f32.mrf.mxu0
    %v297 = vadd.f32 0.0, %v296
    %v298 = vpop.f32.mrf.mxu0
    %v299 = vadd.f32 0.0, %v298
    %300 = vmatmul.bf16.gmra.mxu0 %v279
    %v301 = vpop.f32.mrf.mxu0
    %v302 = vadd.f32 0.0, %v301
    %v303 = vpop.f32.mrf.mxu0
    %v304 = vadd.f32 0.0, %v303
    %305 = vmatmul.bf16.gmra.mxu0 %v282
    %v306 = vpop.f32.mrf.mxu0
    %v307 = vadd.f32 0.0, %v306
    %v308 = vpop.f32.mrf.mxu0
    %v309 = vadd.f32 0.0, %v308
    %310 = vmatmul.bf16.gmra.mxu0 %v285
    %v311 = vpop.f32.mrf.mxu0
    %v312 = vadd.f32 0.0, %v311
    %v313 = vpop.f32.mrf.mxu0
    %v314 = vadd.f32 0.0, %v313
    %315 = vdwg.mxu0
    %v316 = vpack.c.bf16 %v297, %v297
    %v317 = vpack.c.bf16 %v299, %v299
    %v318 = vpack.c.bf16 %v302, %v302
    %v319 = vpack.c.bf16 %v304, %v304
    %v320 = vpack.c.bf16 %v307, %v307
    %v321 = vpack.c.bf16 %v309, %v309
    %v322 = vpack.c.bf16 %v312, %v312
    %v323 = vpack.c.bf16 %v314, %v314
    %vm324 = vcmp.ge.s32.totalorder %v229, 16
    %vm325 = vmpackc.low %vm324, %vm324
    %v326 = vsel %vm325, %v316, %v220
    %v327 = vsel %vm325, %v317, %v221
    %v328 = vsel %vm325, %v318, %v222
    %v329 = vsel %vm325, %v319, %v223
    %v330 = vsel %vm325, %v320, %v224
    %v331 = vsel %vm325, %v321, %v225
    %v332 = vsel %vm325, %v322, %v226
    %v333 = vsel %vm325, %v323, %v227
    %v342 = vunpack.c.l.b16 %v326
    %v343 = vunpack.c.l.b16 %v327
    %v344 = vunpack.c.l.b16 %v328
    %v345 = vunpack.c.l.b16 %v329
    %v346 = vunpack.c.l.b16 %v330
    %v347 = vunpack.c.l.b16 %v331
    %v348 = vunpack.c.l.b16 %v332
    %v349 = vunpack.c.l.b16 %v333
    %v350 = vpack.c.b16 %v343, %v342
    %v351 = vpack.c.b16 %v345, %v344
    %v352 = vpack.c.b16 %v347, %v346
    %v353 = vpack.c.b16 %v349, %v348
    %358 = vmatpush.bf16.msra.mxu0 0
    %359 = vmatpush.bf16.msra.mxu0 0
    %360 = vmatpush.bf16.msra.mxu0 0
    %361 = vmatpush.bf16.msra.mxu0 0
    %362 = vmatpush.bf16.msra.mxu0 %v353
    %363 = vmatpush.bf16.msra.mxu0 %v352
    %364 = vmatpush.bf16.msra.mxu0 %v351
    %365 = vmatpush.bf16.msra.mxu0 %v350
    %366 = vmatmul.bf16.gmra.mxu0 %v276
    %v367 = vpop.f32.mrf.mxu0
    %v368 = vadd.f32 0.0, %v367
    %v369 = vpop.f32.mrf.mxu0
    %v370 = vadd.f32 0.0, %v369
    %371 = vmatmul.bf16.gmra.mxu0 %v279
    %v372 = vpop.f32.mrf.mxu0
    %v373 = vadd.f32 0.0, %v372
    %v374 = vpop.f32.mrf.mxu0
    %v375 = vadd.f32 0.0, %v374
    %376 = vmatmul.bf16.gmra.mxu0 %v282
    %v377 = vpop.f32.mrf.mxu0
    %v378 = vadd.f32 0.0, %v377
    %v379 = vpop.f32.mrf.mxu0
    %v380 = vadd.f32 0.0, %v379
    %381 = vmatmul.bf16.gmra.mxu0 %v285
    %v382 = vpop.f32.mrf.mxu0
    %v383 = vadd.f32 0.0, %v382
    %v384 = vpop.f32.mrf.mxu0
    %v385 = vadd.f32 0.0, %v384
    %386 = vdwg.mxu0
    %v387 = vpack.c.bf16 %v368, %v368
    %v388 = vpack.c.bf16 %v370, %v370
    %v389 = vpack.c.bf16 %v373, %v373
    %v390 = vpack.c.bf16 %v375, %v375
    %v391 = vpack.c.bf16 %v378, %v378
    %v392 = vpack.c.bf16 %v380, %v380
    %v393 = vpack.c.bf16 %v383, %v383
    %v394 = vpack.c.bf16 %v385, %v385
    %vm395 = vcmp.ge.s32.totalorder %v229, 32
    %vm396 = vmpackc.low %vm395, %vm395
    %v397 = vsel %vm396, %v387, %v326
    %v398 = vsel %vm396, %v388, %v327
    %v399 = vsel %vm396, %v389, %v328
    %v400 = vsel %vm396, %v390, %v329
    %v401 = vsel %vm396, %v391, %v330
    %v402 = vsel %vm396, %v392, %v331
    %v403 = vsel %vm396, %v393, %v332
    %v404 = vsel %vm396, %v394, %v333
    %v405 = vperm.slane %v133, 0
    %v414 = vunpack.c.l.b16 %v397
    %v415 = vunpack.c.l.b16 %v398
    %v416 = vunpack.c.l.b16 %v399
    %v417 = vunpack.c.l.b16 %v400
    %v418 = vunpack.c.l.b16 %v401
    %v419 = vunpack.c.l.b16 %v402
    %v420 = vunpack.c.l.b16 %v403
    %v421 = vunpack.c.l.b16 %v404
    %v422 = vpack.c.b16 %v415, %v414
    %v423 = vpack.c.b16 %v417, %v416
    %v424 = vpack.c.b16 %v419, %v418
    %v425 = vpack.c.b16 %v421, %v420
    %v446 = vunpack.c.l.b16 %v116
    %v447 = vunpack.c.l.b16 %v117
    %v448 = vunpack.c.l.b16 %v118
    %v449 = vunpack.c.l.b16 %v119
    %v450 = vunpack.c.l.b16 %v120
    %v451 = vunpack.c.l.b16 %v121
    %v452 = vunpack.c.l.b16 %v122
    %v453 = vunpack.c.l.b16 %v123
    %v454 = vunpack.c.l.b16 %v124
    %v455 = vunpack.c.l.b16 %v125
    %v456 = vunpack.c.l.b16 %v126
    %v457 = vunpack.c.l.b16 %v127
    %v458 = vunpack.c.l.b16 %v128
    %v459 = vunpack.c.l.b16 %v129
    %v460 = vunpack.c.l.b16 %v130
    %v461 = vunpack.c.l.b16 %v131
    %v462 = vpack.c.b16 %v447, %v446
    %v463 = vpack.c.b16 %v449, %v448
    %v464 = vpack.c.b16 %v451, %v450
    %v465 = vpack.c.b16 %v453, %v452
    %v466 = vpack.c.b16 %v455, %v454
    %v467 = vpack.c.b16 %v457, %v456
    %v468 = vpack.c.b16 %v459, %v458
    %v469 = vpack.c.b16 %v461, %v460
    %478 = vmatpush.bf16.msra.mxu0 %v469
    %479 = vmatpush.bf16.msra.mxu0 %v468
    %480 = vmatpush.bf16.msra.mxu0 %v467
    %481 = vmatpush.bf16.msra.mxu0 %v466
    %482 = vmatpush.bf16.msra.mxu0 %v465
    %483 = vmatpush.bf16.msra.mxu0 %v464
    %484 = vmatpush.bf16.msra.mxu0 %v463
    %485 = vmatpush.bf16.msra.mxu0 %v462
    %486 = vmatmul.bf16.gmra.mxu0 %v422
    %v487 = vpop.f32.mrf.mxu0
    %v488 = vadd.f32 %v405, %v487
    %v489 = vpop.f32.mrf.mxu0
    %v490 = vadd.f32 %v405, %v489
    %491 = vmatmul.bf16.gmra.mxu0 %v423
    %v492 = vpop.f32.mrf.mxu0
    %v493 = vadd.f32 %v405, %v492
    %v494 = vpop.f32.mrf.mxu0
    %v495 = vadd.f32 %v405, %v494
    %496 = vmatmul.bf16.gmra.mxu0 %v424
    %v497 = vpop.f32.mrf.mxu0
    %v498 = vadd.f32 %v405, %v497
    %v499 = vpop.f32.mrf.mxu0
    %v500 = vadd.f32 %v405, %v499
    %501 = vmatmul.bf16.gmra.mxu0 %v425
    %v502 = vpop.f32.mrf.mxu0
    %v503 = vadd.f32 %v405, %v502
    %v504 = vpop.f32.mrf.mxu0
    %v505 = vadd.f32 %v405, %v504
    %506 = vdwg.mxu0
    %vm507 = vcmp.lt.s32.totalorder %v229, 8
    %v508 = vsel %vm507, %v488, -1e+30
    %v509 = vsel %vm507, %v490, -1e+30
    %v510 = vsel %vm507, %v493, -1e+30
    %v511 = vsel %vm507, %v495, -1e+30
    %v512 = vsel %vm507, %v498, -1e+30
    %v513 = vsel %vm507, %v500, -1e+30
    %v514 = vsel %vm507, %v503, -1e+30
    %v515 = vsel %vm507, %v505, -1e+30
    %516 = vmax.xlane.f32.xlu0 %v508
    %v517 = vpop.xlane.xlu0 %516
    %518 = vmax.xlane.f32.xlu0 %v509
    %v519 = vpop.xlane.xlu0 %518
    %520 = vmax.xlane.f32.xlu0 %v510
    %v521 = vpop.xlane.xlu0 %520
    %522 = vmax.xlane.f32.xlu0 %v511
    %v523 = vpop.xlane.xlu0 %522
    %524 = vmax.xlane.f32.xlu0 %v512
    %v525 = vpop.xlane.xlu0 %524
    %526 = vmax.xlane.f32.xlu0 %v513
    %v527 = vpop.xlane.xlu0 %526
    %528 = vmax.xlane.f32.xlu0 %v514
    %v529 = vpop.xlane.xlu0 %528
    %530 = vmax.xlane.f32.xlu0 %v515
    %v531 = vpop.xlane.xlu0 %530
    %v532 = vsub.f32 %v508, %v517
    %v533 = vsub.f32 %v509, %v519
    %v534 = vsub.f32 %v510, %v521
    %v535 = vsub.f32 %v511, %v523
    %v536 = vsub.f32 %v512, %v525
    %v537 = vsub.f32 %v513, %v527
    %v538 = vsub.f32 %v514, %v529
    %v539 = vsub.f32 %v515, %v531
    %v540 = vmul.f32 %v532, 1.442695
    %v541 = vpow.pop %v540
    %v542 = vmul.f32 %v533, 1.442695
    %v543 = vpow.pop %v542
    %v544 = vmul.f32 %v534, 1.442695
    %v545 = vpow.pop %v544
    %v546 = vmul.f32 %v535, 1.442695
    %v547 = vpow.pop %v546
    %v548 = vmul.f32 %v536, 1.442695
    %v549 = vpow.pop %v548
    %v550 = vmul.f32 %v537, 1.442695
    %v551 = vpow.pop %v550
    %v552 = vmul.f32 %v538, 1.442695
    %v553 = vpow.pop %v552
    %v554 = vmul.f32 %v539, 1.442695
    %v555 = vpow.pop %v554
    %v556 = vsel %vm507, %v541, 0.0
    %v557 = vsel %vm507, %v543, 0.0
    %v558 = vsel %vm507, %v545, 0.0
    %v559 = vsel %vm507, %v547, 0.0
    %v560 = vsel %vm507, %v549, 0.0
    %v561 = vsel %vm507, %v551, 0.0
    %v562 = vsel %vm507, %v553, 0.0
    %v563 = vsel %vm507, %v555, 0.0
    %564 = vadd.xlane.f32.xlu0 %v556
    %v565 = vpop.xlane.xlu0 %564
    %566 = vadd.xlane.f32.xlu0 %v557
    %v567 = vpop.xlane.xlu0 %566
    %568 = vadd.xlane.f32.xlu0 %v558
    %v569 = vpop.xlane.xlu0 %568
    %570 = vadd.xlane.f32.xlu0 %v559
    %v571 = vpop.xlane.xlu0 %570
    %572 = vadd.xlane.f32.xlu0 %v560
    %v573 = vpop.xlane.xlu0 %572
    %574 = vadd.xlane.f32.xlu0 %v561
    %v575 = vpop.xlane.xlu0 %574
    %576 = vadd.xlane.f32.xlu0 %v562
    %v577 = vpop.xlane.xlu0 %576
    %578 = vadd.xlane.f32.xlu0 %v563
    %v579 = vpop.xlane.xlu0 %578
    %v580 = vlog2.pop %v565
    %v581 = vmul.f32 %v580, 0.6931472
    %v582 = vlog2.pop %v567
    %v583 = vmul.f32 %v582, 0.6931472
    %v584 = vlog2.pop %v569
    %v585 = vmul.f32 %v584, 0.6931472
    %v586 = vlog2.pop %v571
    %v587 = vmul.f32 %v586, 0.6931472
    %v588 = vlog2.pop %v573
    %v589 = vmul.f32 %v588, 0.6931472
    %v590 = vlog2.pop %v575
    %v591 = vmul.f32 %v590, 0.6931472
    %v592 = vlog2.pop %v577
    %v593 = vmul.f32 %v592, 0.6931472
    %v594 = vlog2.pop %v579
    %v595 = vmul.f32 %v594, 0.6931472
    %v596 = vsub.f32 %v532, %v581
    %v597 = vsub.f32 %v533, %v583
    %v598 = vsub.f32 %v534, %v585
    %v599 = vsub.f32 %v535, %v587
    %v600 = vsub.f32 %v536, %v589
    %v601 = vsub.f32 %v537, %v591
    %v602 = vsub.f32 %v538, %v593
    %v603 = vsub.f32 %v539, %v595
    %v604 = vsel %vm507, %v596, 0.0
    %v605 = vsel %vm507, %v597, 0.0
    %v606 = vsel %vm507, %v598, 0.0
    %v607 = vsel %vm507, %v599, 0.0
    %v608 = vsel %vm507, %v600, 0.0
    %v609 = vsel %vm507, %v601, 0.0
    %v610 = vsel %vm507, %v602, 0.0
    %v611 = vsel %vm507, %v603, 0.0
    %612 = vst [vmem:[#allocation10] sm:$0xff] %v604
    %613 = vst [vmem:[#allocation10 + $0x8] sm:$0xff] %v605
    %614 = vst [vmem:[#allocation10 + $0x10] sm:$0xff] %v606
    %615 = vst [vmem:[#allocation10 + $0x18] sm:$0xff] %v607
    %616 = vst [vmem:[#allocation10 + $0x20] sm:$0xff] %v608
    %617 = vst [vmem:[#allocation10 + $0x28] sm:$0xff] %v609
    %618 = vst [vmem:[#allocation10 + $0x30] sm:$0xff] %v610
    %619 = vst [vmem:[#allocation10 + $0x38] sm:$0xff] %v611
    // Predicated region
    $region34: #{ngcn_forward.1} parent=1 // pred_check
      _
    $region35: #{ngcn_forward.1} parent=1 // pred_check_branch
      %621 = sbr.rel (0) target = $region37
    $region36: #{ngcn_forward.1} parent=1 // pred_region
      %623 = vsyncadd [#allocation4], 0
      %s624 = sshll.u32 [#allocation10], 4
      %s625 = int_to_ptr.vmem [resolvable:$true] %s624
      %s626 = sshll.u32 %s4, 4
      %s627 = int_to_ptr.hbm [resolvable:$true] %s626
      %632 = dma.vmem_to_hbm [thread:$0]  %s625, 1024, %s627, [#allocation4], 128, 128, 8
    $region37: #{ngcn_forward.1} parent=1 // pred_fallthru
      _
    // Predicated region
    $region38: #{ngcn_forward.1} parent=1 // pred_check
      _
    $region39: #{ngcn_forward.1} parent=1 // pred_check_branch
      %634 = sbr.rel (0) target = $region41
    $region40: #{ngcn_forward.1} parent=1 // pred_region
      %636 = dma.done [#allocation4], 1024
    $region41: #{ngcn_forward.1} parent=1 // pred_fallthru
      _
    %637 = vsyncpa [#allocation3], 1
    %638 = vsyncpa [#allocation6], 1
    %639 = vsyncpa [#allocation9], 1
    %640 = vsyncpa [#allocation4], 1

</llo_original>
